<compile_context>
chip_gen: v6e
topology: v6e:2x2x1
jax: 0.10.0
libtpu: 0.0.40
codegen_flags: <defaults>
</compile_context>

<pallas_src>
import functools

import jax
import jax.numpy as jnp
from jax.experimental import pallas as pl
from jax.experimental.pallas import tpu as pltpu

_LANES = 128
_SUBLANES = 8
_NUM_CORES = 2                            # v7x megacore split; no harm elsewhere
_TARGET_BLOCK_BYTES = 4 * 1024 * 1024     # per input, per pipeline buffer
_VMEM_LIMIT_BYTES = 32 * 1024 * 1024      # 2 inputs x 2 buffers x 4 MiB + slack


def _mape_kernel(pred_ref, true_ref, out_ref, *, eps, rows_valid, tile_rows,
                 blocks_per_core):
    c = pl.program_id(0)
    i = pl.program_id(1)
    b = c * blocks_per_core + i           # logical (unclamped) block index

    @pl.when(i == 0)
    def _():
        out_ref[...] = jnp.zeros_like(out_ref)

    # Up-cast inside the kernel (inputs stream from HBM in native dtype).
    p = pred_ref[...].astype(jnp.float32)
    t = true_ref[...].astype(jnp.float32)

    # |where(|t|<eps, eps, t)| == max(|t|, eps): drops a compare+select and
    # pushes the divide onto the EUP slot via reciprocal.
    denom = jnp.maximum(jnp.abs(t), eps)
    ape = jnp.abs(p - t) * pl.reciprocal(denom, approx=False)

    def _accumulate(vals):
        # Fold (tile_rows, 128) onto a vreg-shaped (8, 128) partial sum with
        # pure VPU adds; the cross-lane reduce happens once, in the wrapper.
        out_ref[...] += jnp.sum(
            vals.reshape(1, tile_rows // _SUBLANES, _SUBLANES, _LANES), axis=1)

    block_start = b * tile_rows           # row units (no int32 overflow risk)
    needs_mask = block_start + tile_rows > rows_valid

    # Steady state: full in-bounds block, no masking at all.
    @pl.when(jnp.logical_not(needs_mask))
    def _():
        _accumulate(ape)

    # Epilogue: block overhangs the data (partial last Pallas block and/or
    # the clamped duplicate block when the total block count is odd).  Only
    # whole garbage rows need masking; zero-padded tail lanes contribute 0.
    @pl.when(needs_mask)
    def _():
        row_ids = jax.lax.broadcasted_iota(jnp.int32, (tile_rows, _LANES), 0)
        _accumulate(jnp.where(block_start + row_ids < rows_valid, ape, 0.0))


def _row_align(dtype) -> int:
    # Sublane block granularity: 8 for 32-bit, 16 for 16-bit, 32 for 8-bit.
    itemsize = jnp.dtype(dtype).itemsize
    return _SUBLANES * max(1, 4 // itemsize)


def _round_up(x: int, m: int) -> int:
    return ((x + m - 1) // m) * m


def mape_loss(pred: jax.Array, true: jax.Array, eps: float = 1e-8) -> jax.Array:
    assert pred.shape == true.shape
    n_valid = pred.size

    pred_f = pred.reshape(-1)
    true_f = true.reshape(-1)

    # Lane pad (<=127 zeros); padded zeros contribute exactly 0 to the sum.
    # NOTE: when size % 128 != 0 this pad materializes one HBM copy of each
    # input; the common multiple-of-128 case takes the free-reshape path.
    # TODO(synk): for huge ragged inputs, process the <128-element tail
    # separately to avoid the full-array pad copy.
    n_pad = (-n_valid) % _LANES
    if n_pad:
        pred_f = jnp.pad(pred_f, (0, n_pad))
        true_f = jnp.pad(true_f, (0, n_pad))

    rows = pred_f.shape[0] // _LANES
    pred2d = pred_f.reshape(rows, _LANES)
    true2d = true_f.reshape(rows, _LANES)

    # Dtype-aware byte-budget tile: ~4 MiB per input per buffer.
    align = max(_row_align(pred.dtype), _row_align(true.dtype))
    itemsize = max(jnp.dtype(pred.dtype).itemsize, jnp.dtype(true.dtype).itemsize)
    target_rows = max(align, _TARGET_BLOCK_BYTES // (_LANES * itemsize))
    tile_rows = min(_round_up(target_rows, align), _round_up(rows, align))

    total_blocks = pl.cdiv(rows, tile_rows)
    blocks_per_core = pl.cdiv(total_blocks, _NUM_CORES)
    grid = (_NUM_CORES, blocks_per_core)

    def data_map(c, i):
        # Clamp the (at most one) out-of-range duplicate block; it is fully
        # masked out inside the kernel.
        return (jnp.minimum(c * blocks_per_core + i, total_blocks - 1), 0)

    kernel = functools.partial(
        _mape_kernel, eps=float(eps), rows_valid=rows, tile_rows=tile_rows,
        blocks_per_core=blocks_per_core)

    partial_sums = pl.pallas_call(
        kernel,
        out_shape=jax.ShapeDtypeStruct((_NUM_CORES, _SUBLANES, _LANES),
                                       jnp.float32),
        grid_spec=pltpu.PrefetchScalarGridSpec(
            num_scalar_prefetch=0,
            grid=grid,
            in_specs=[
                pl.BlockSpec((tile_rows, _LANES), data_map),
                pl.BlockSpec((tile_rows, _LANES), data_map),
            ],
            out_specs=pl.BlockSpec((1, _SUBLANES, _LANES),
                                   lambda c, i: (c, 0, 0)),
        ),
        compiler_params=pltpu.CompilerParams(
            dimension_semantics=("parallel", "arbitrary"),
            vmem_limit_bytes=_VMEM_LIMIT_BYTES,
        ),
    )(pred2d, true2d)

    # Tiny cross-lane reduce + mean (2*8*128 elements) stays in XLA.
    return jnp.sum(partial_sums) / n_valid


def _reference(pred, true, eps=1e-8):
    p = pred.astype(jnp.float32)
    t = true.astype(jnp.float32)
    denom = jnp.where(jnp.abs(t) < eps, jnp.full_like(t, eps), t)
    return jnp.mean(jnp.abs((p - t) / denom))


if __name__ == "__main__":
    key = jax.random.PRNGKey(0)
    k1, k2, k3, k4, k5, k6, k7, k8 = jax.random.split(key, 8)

    # --- Main case: NCHW-like f32 input with near-zero targets (eps branch) ---
    pred = jax.random.normal(k1, (2, 4, 16, 16), dtype=jnp.float32)
    true = jax.random.normal(k2, (2, 4, 16, 16), dtype=jnp.float32)
    true = true.at[0, 0, 0, :4].set(jnp.array([0.0, 1e-12, -1e-12, 0.0]))
    loss = mape_loss(pred, true)
    jax.block_until_ready(loss)
    ref = _reference(pred, true)
    assert jnp.allclose(loss, ref, rtol=1e-5, atol=1e-5), (loss, ref)

    # --- bf16 inputs: in-kernel up-cast path ---
    pred_bf = jax.random.normal(k3, (2, 4, 16, 16), dtype=jnp.float32).astype(jnp.bfloat16)
    true_bf = (jax.random.normal(k4, (2, 4, 16, 16), dtype=jnp.float32) + 2.0).astype(jnp.bfloat16)
    loss_bf = mape_loss(pred_bf, true_bf)
    jax.block_until_ready(loss_bf)
    ref_bf = _reference(pred_bf, true_bf)
    assert jnp.allclose(loss_bf, ref_bf, rtol=1e-5, atol=1e-5), (loss_bf, ref_bf)

    # --- Ragged size (not a multiple of 128): lane-pad + masked epilogue ---
    pred_r = jax.random.normal(k5, (3, 5, 13), dtype=jnp.float32)
    true_r = jax.random.normal(k6, (3, 5, 13), dtype=jnp.float32) + 1.0
    loss_r = mape_loss(pred_r, true_r)
    jax.block_until_ready(loss_r)
    ref_r = _reference(pred_r, true_r)
    assert jnp.allclose(loss_r, ref_r, rtol=1e-5, atol=1e-5), (loss_r, ref_r)

    # --- Multi-block case (odd block count): exercises the 2-core split,
    #     the unmasked steady state, the partial-block epilogue, and the
    #     clamped duplicate block. ---
    pred_l = jax.random.normal(k7, (64, 1024, 33), dtype=jnp.float32)
    true_l = jax.random.normal(k8, (64, 1024, 33), dtype=jnp.float32) + 1.0
    loss_l = mape_loss(pred_l, true_l)
    jax.block_until_ready(loss_l)
    ref_l = _reference(pred_l, true_l)
    assert jnp.allclose(loss_l, ref_l, rtol=1e-4, atol=1e-5), (loss_l, ref_l)

    print("KERNEL_OK")
</pallas_src>

<mosaic_0001>
module attributes {stable_mosaic.version = 11 : i64} {
  func.func @_mape_kernel(%arg0: i32, %arg1: i32, %arg2: memref<16x128xf32, #tpu.memory_space<vmem>>, %arg3: memref<16x128xf32, #tpu.memory_space<vmem>>, %arg4: memref<1x8x128xf32, #tpu.memory_space<vmem>>) attributes {dimension_semantics = [#tpu.dimension_semantics<parallel>, #tpu.dimension_semantics<arbitrary>], iteration_bounds = array<i64: 2, 1>, scalar_prefetch = 0 : i64, scratch_operands = 0 : i64, tpu.core_type = #tpu.core_type<tc>, window_params = [{transform_indices = @transform_0, window_bounds = array<i64: 16, 128>}, {transform_indices = @transform_1, window_bounds = array<i64: 16, 128>}, {transform_indices = @transform_2, window_bounds = array<i64: 1, 8, 128>}]} {
    %c1_i32 = arith.constant 1 : i32
    %0 = arith.muli %arg0, %c1_i32 : i32
    %1 = arith.addi %0, %arg1 : i32
    %c0_i32 = arith.constant 0 : i32
    %2 = arith.cmpi eq, %arg1, %c0_i32 : i32
    %3 = arith.extui %2 : i1 to i32
    %c0_i32_0 = arith.constant 0 : i32
    %4 = arith.cmpi ne, %3, %c0_i32_0 : i32
    scf.if %4 {
      %cst_8 = arith.constant 0.000000e+00 : f32
      %22 = vector.broadcast %cst_8 : f32 to vector<1x8x128xf32>
      %c0_9 = arith.constant 0 : index
      %c0_10 = arith.constant 0 : index
      %c0_11 = arith.constant 0 : index
      %23 = vector.load %arg4[%c0_9, %c0_10, %c0_11] : memref<1x8x128xf32, #tpu.memory_space<vmem>>, vector<1x8x128xf32>
      tpu.vector_store %arg4[%c0_9, %c0_10, %c0_11], %22 {strides = array<i32>} : memref<1x8x128xf32, #tpu.memory_space<vmem>>, vector<1x8x128xf32>,
    } else {
    }
    %c0 = arith.constant 0 : index
    %c0_1 = arith.constant 0 : index
    %5 = vector.load %arg2[%c0, %c0_1] : memref<16x128xf32, #tpu.memory_space<vmem>>, vector<16x128xf32>
    %c0_2 = arith.constant 0 : index
    %c0_3 = arith.constant 0 : index
    %6 = vector.load %arg3[%c0_2, %c0_3] : memref<16x128xf32, #tpu.memory_space<vmem>>, vector<16x128xf32>
    %7 = math.absf %6 : vector<16x128xf32>
    %cst = arith.constant 9.99999993E-9 : f32
    %8 = vector.broadcast %cst : f32 to vector<16x128xf32>
    %9 = arith.maximumf %7, %8 : vector<16x128xf32>
    %10 = arith.subf %5, %6 : vector<16x128xf32>
    %11 = math.absf %10 : vector<16x128xf32>
    %12 = tpu.reciprocal %9 : vector<16x128xf32> -> vector<16x128xf32>
    %13 = arith.mulf %11, %12 : vector<16x128xf32>
    %c16_i32 = arith.constant 16 : i32
    %14 = arith.muli %1, %c16_i32 : i32
    %c16_i32_4 = arith.constant 16 : i32
    %15 = arith.addi %14, %c16_i32_4 : i32
    %c16_i32_5 = arith.constant 16 : i32
    %16 = arith.cmpi sgt, %15, %c16_i32_5 : i32
    %true = arith.constant true
    %17 = arith.xori %16, %true : i1
    %18 = arith.extui %17 : i1 to i32
    %c0_i32_6 = arith.constant 0 : i32
    %19 = arith.cmpi ne, %18, %c0_i32_6 : i32
    scf.if %19 {
      %c0_8 = arith.constant 0 : index
      %c0_9 = arith.constant 0 : index
      %c0_10 = arith.constant 0 : index
      %22 = vector.load %arg4[%c0_8, %c0_9, %c0_10] : memref<1x8x128xf32, #tpu.memory_space<vmem>>, vector<1x8x128xf32>
      %23 = vector.shape_cast %13 : vector<16x128xf32> to vector<1x2x8x128xf32>
      %cst_11 = arith.constant dense<0.000000e+00> : vector<1x8x128xf32>
      %24 = vector.multi_reduction <add>, %23, %cst_11 [1] : vector<1x2x8x128xf32> to vector<1x8x128xf32>
      %25 = arith.addf %22, %24 : vector<1x8x128xf32>
      %c0_12 = arith.constant 0 : index
      %c0_13 = arith.constant 0 : index
      %c0_14 = arith.constant 0 : index
      %26 = vector.load %arg4[%c0_12, %c0_13, %c0_14] : memref<1x8x128xf32, #tpu.memory_space<vmem>>, vector<1x8x128xf32>
      tpu.vector_store %arg4[%c0_12, %c0_13, %c0_14], %25 {strides = array<i32>} : memref<1x8x128xf32, #tpu.memory_space<vmem>>, vector<1x8x128xf32>,
    } else {
    }
    %20 = arith.extui %16 : i1 to i32
    %c0_i32_7 = arith.constant 0 : i32
    %21 = arith.cmpi ne, %20, %c0_i32_7 : i32
    scf.if %21 {
      %22 = tpu.iota {dimensions = array<i32: 0>} : vector<16x128xi32>
      %23 = vector.broadcast %14 : i32 to vector<16x128xi32>
      %24 = arith.addi %23, %22 : vector<16x128xi32>
      %c16_i32_8 = arith.constant 16 : i32
      %25 = vector.broadcast %c16_i32_8 : i32 to vector<16x128xi32>
      %26 = arith.cmpi slt, %24, %25 : vector<16x128xi32>
      %cst_9 = arith.constant 0.000000e+00 : f32
      %27 = vector.broadcast %cst_9 : f32 to vector<16x128xf32>
      %28 = arith.select %26, %13, %27 : vector<16x128xi1>, vector<16x128xf32>
      %c0_10 = arith.constant 0 : index
      %c0_11 = arith.constant 0 : index
      %c0_12 = arith.constant 0 : index
      %29 = vector.load %arg4[%c0_10, %c0_11, %c0_12] : memref<1x8x128xf32, #tpu.memory_space<vmem>>, vector<1x8x128xf32>
      %30 = vector.shape_cast %28 : vector<16x128xf32> to vector<1x2x8x128xf32>
      %cst_13 = arith.constant dense<0.000000e+00> : vector<1x8x128xf32>
      %31 = vector.multi_reduction <add>, %30, %cst_13 [1] : vector<1x2x8x128xf32> to vector<1x8x128xf32>
      %32 = arith.addf %29, %31 : vector<1x8x128xf32>
      %c0_14 = arith.constant 0 : index
      %c0_15 = arith.constant 0 : index
      %c0_16 = arith.constant 0 : index
      %33 = vector.load %arg4[%c0_14, %c0_15, %c0_16] : memref<1x8x128xf32, #tpu.memory_space<vmem>>, vector<1x8x128xf32>
      tpu.vector_store %arg4[%c0_14, %c0_15, %c0_16], %32 {strides = array<i32>} : memref<1x8x128xf32, #tpu.memory_space<vmem>>, vector<1x8x128xf32>,
    } else {
    }
    return
  }
  func.func @transform_0(%arg0: i32, %arg1: i32) -> (i32, i32) {
    %c1_i32 = arith.constant 1 : i32
    %0 = arith.muli %arg0, %c1_i32 : i32
    %1 = arith.addi %0, %arg1 : i32
    %c0_i32 = arith.constant 0 : i32
    %2 = arith.minsi %1, %c0_i32 : i32
    %c0_i32_0 = arith.constant 0 : i32
    %c0_i32_1 = arith.constant 0 : i32
    return %2, %c0_i32_0 : i32, i32
  }
  func.func @transform_1(%arg0: i32, %arg1: i32) -> (i32, i32) {
    %c1_i32 = arith.constant 1 : i32
    %0 = arith.muli %arg0, %c1_i32 : i32
    %1 = arith.addi %0, %arg1 : i32
    %c0_i32 = arith.constant 0 : i32
    %2 = arith.minsi %1, %c0_i32 : i32
    %c0_i32_0 = arith.constant 0 : i32
    %c0_i32_1 = arith.constant 0 : i32
    return %2, %c0_i32_0 : i32, i32
  }
  func.func @transform_2(%arg0: i32, %arg1: i32) -> (i32, i32, i32) {
    %c0_i32 = arith.constant 0 : i32
    %c0_i32_0 = arith.constant 0 : i32
    %c0_i32_1 = arith.constant 0 : i32
    return %arg0, %c0_i32, %c0_i32_0 : i32, i32, i32
  }
}

</mosaic_0001>

<llo_original>
// kernel: tpu_custom_call.1
$region0: #{tpu_custom_call.1}
  #allocation0 [shape = 'u32[]', space=smem, size = 0x4, offset = 0x4, fixed_abs, tag = 'smem constant byte address 0x4 - core index']
  #allocation1 [shape = 'u32[144,128]{1,0:T(1,128)}', space=vmem, size = 0x12000, scoped, tag = 'internal scratch']
  %s0 = inlined_call_operand.hbm [shape: f32[16,128], index: 0, kind: input, shape index: {}]
  %s1 = inlined_call_operand.hbm [shape: f32[16,128], index: 1, kind: input, shape index: {}]
  %s2 = inlined_call_operand.hbm [shape: f32[2,8,128], index: 2, kind: output, shape index: {}]
  %s3 = sld [smem:[#allocation0]]
  $region61: #{tpu_custom_call.1} parent=0
    _
  %s5 = ssub.s32 1, %s3
  %s6 = scalar_select 0, %s5, %s3
  $region1: #{tpu_custom_call.1} parent=0
    #allocation2 [shape = 'u8[16384]{0}', space=vmem, size = 0x4000, scoped, tag = 'input window, operand 0']
    #allocation3 [shape = 's32[2]{0}', space=sflag, size = 0x8, scoped, tag = 'scoped memory for tpu_custom_call.1']
    #allocation4 [shape = 's32[2]{0}', space=sflag, size = 0x8, scoped, tag = 'scoped memory for tpu_custom_call.1']
    #allocation5 [shape = 'u8[16384]{0}', space=vmem, size = 0x4000, scoped, tag = 'input window, operand 1']
    #allocation6 [shape = 's32[2]{0}', space=sflag, size = 0x8, scoped, tag = 'scoped memory for tpu_custom_call.1']
    #allocation7 [shape = 'u8[8192]{0}', space=vmem, size = 0x2000, scoped, tag = 'output window, operand 0']
    %7 = vsyncpa [#allocation3], 0
    %s8 = scalar_lea.sflag [#allocation3], 1
    %9 = vsyncpa %s8, 0
    %10 = vsyncpa [#allocation6], 0
    %s11 = scalar_lea.sflag [#allocation6], 1
    %12 = vsyncpa %s11, 0
    %13 = vsyncpa [#allocation4], 0
    %s14 = scalar_lea.sflag [#allocation4], 1
    %15 = vsyncpa %s14, 0
    loop: start=0, step=1, limit=4
    $region2: #{tpu_custom_call.1} parent=1 // loop_pre_header
      _
    $region3: #{tpu_custom_call.1} parent=1 // loop_header
      %s17 = sphi 0, %s21
      %p18 = scmp.ge.s32.totalorder %s17, 4
      %s24 = sphi 0, %s36
      %s25 = sphi 0, %s32
      %s26 = sphi 0, %s24
      %s27 = sphi 0, %s25
      %s28 = sphi 0, %s26
      %s29 = sphi 0, %s27
      %s45 = sphi 0, %s47
      %s48 = sphi 0, %s45
      %s49 = sphi 0, %s48
      %s65 = sphi 0, %s49
      %s77 = sphi 0, %s79
      %s80 = sphi 0, %s77
      %s81 = sphi 0, %s80
      %s97 = sphi 0, %s81
      %s103 = sphi 0, %s105
      %s106 = sphi 0, %s103
      %s107 = sphi 0, %s106
      %s123 = sphi 0, %s107
    $region4: #{tpu_custom_call.1} parent=1 // loop_header_branch
      %20 = sbr.rel (%p18) target = $region8
    $region5: #{tpu_custom_call.1} parent=1 // loop_body
      %s22 = ssub.s32 %s17, 1
      %s23 = ssub.s32 %s17, 2
      %s30 = sadd.s32 1, %s25
      %p31 = scmp.ge.s32.totalorder %s30, 1
      %s32 = scalar_select %p31, 0, %s30
      %s33 = sadd.s32 1, %s24
      %s34 = scalar_select %p31, %s33, %s24
      %p35 = scmp.ge.s32.totalorder %s34, 2
      %s36 = scalar_select %p35, 0, %s34
      %s37 = sadd.s32 %s24, %s25
      %p38 = scmp.lt.s32.totalorder %s37, 0
      %s39 = scalar_select %p38, %s37, 0
      %s40 = sadd.s32 %s36, %s32
      %p41 = scmp.lt.s32.totalorder %s40, 0
      %s42 = scalar_select %p41, %s40, 0
      %s43 = ssub.s32 %s39, %s42
      %p44 = scmp.eq.s32.totalorder %s43, 0
      %s46 = sadd.s32 %s45, 1
      %s47 = scalar_select %p44, %s45, %s46
      %p50 = pneg %p44
      %p51 = scmp.eq.s32.totalorder %s17, 1
      %p52 = por %p50, %p51
      %p53 = scmp.ne.s32.totalorder %s45, %s48
      %p54 = scmp.eq.s32.totalorder %s17, 0
      %p55 = por %p53, %p54
      %p56 = scmp.ne.s32.totalorder %s45, %s48
      %p57 = scmp.eq.s32.totalorder %s22, 1
      %p58 = por %p56, %p57
      %p59 = scmp.ne.s32.totalorder %s48, %s49
      %p60 = scmp.eq.s32.totalorder %s22, 0
      %p61 = por %p59, %p60
      %p62 = scmp.ne.s32.totalorder %s48, %s49
      %p63 = scmp.eq.s32.totalorder %s23, 1
      %p64 = por %p62, %p63
      %p66 = scmp.ne.s32.totalorder %s49, %s65
      %p67 = scmp.eq.s32.totalorder %s23, 0
      %p68 = por %p66, %p67
      %s69 = sadd.s32 %s24, %s25
      %p70 = scmp.lt.s32.totalorder %s69, 0
      %s71 = scalar_select %p70, %s69, 0
      %s72 = sadd.s32 %s36, %s32
      %p73 = scmp.lt.s32.totalorder %s72, 0
      %s74 = scalar_select %p73, %s72, 0
      %s75 = ssub.s32 %s71, %s74
      %p76 = scmp.eq.s32.totalorder %s75, 0
      %s78 = sadd.s32 %s77, 1
      %s79 = scalar_select %p76, %s77, %s78
      %p82 = pneg %p76
      %p83 = scmp.eq.s32.totalorder %s17, 1
      %p84 = por %p82, %p83
      %p85 = scmp.ne.s32.totalorder %s77, %s80
      %p86 = scmp.eq.s32.totalorder %s17, 0
      %p87 = por %p85, %p86
      %p88 = scmp.ne.s32.totalorder %s77, %s80
      %p89 = scmp.eq.s32.totalorder %s22, 1
      %p90 = por %p88, %p89
      %p91 = scmp.ne.s32.totalorder %s80, %s81
      %p92 = scmp.eq.s32.totalorder %s22, 0
      %p93 = por %p91, %p92
      %p94 = scmp.ne.s32.totalorder %s80, %s81
      %p95 = scmp.eq.s32.totalorder %s23, 1
      %p96 = por %p94, %p95
      %p98 = scmp.ne.s32.totalorder %s81, %s97
      %p99 = scmp.eq.s32.totalorder %s23, 0
      %p100 = por %p98, %p99
      %s101 = ssub.s32 %s24, %s36
      %p102 = scmp.eq.s32.totalorder %s101, 0
      %s104 = sadd.s32 %s103, 1
      %s105 = scalar_select %p102, %s103, %s104
      %p108 = pneg %p102
      %p109 = scmp.eq.s32.totalorder %s17, 1
      %p110 = por %p108, %p109
      %p111 = scmp.ne.s32.totalorder %s103, %s106
      %p112 = scmp.eq.s32.totalorder %s17, 0
      %p113 = por %p111, %p112
      %p114 = scmp.ne.s32.totalorder %s103, %s106
      %p115 = scmp.eq.s32.totalorder %s22, 1
      %p116 = por %p114, %p115
      %p117 = scmp.ne.s32.totalorder %s106, %s107
      %p118 = scmp.eq.s32.totalorder %s22, 0
      %p119 = por %p117, %p118
      %p120 = scmp.ne.s32.totalorder %s106, %s107
      %p121 = scmp.eq.s32.totalorder %s23, 1
      %p122 = por %p120, %p121
      %p124 = scmp.ne.s32.totalorder %s107, %s123
      %p125 = scmp.eq.s32.totalorder %s23, 0
      %p126 = por %p124, %p125
      %p127 = scmp.le.s32.totalorder 1, %s17
      %p128 = scmp.lt.s32.totalorder %s17, 3
      %p129 = pnand %p127, %p128
      %p130 = pneg %p129
      // Predicated region
      $region9: #{tpu_custom_call.1} parent=5 // pred_check
        _
      $region10: #{tpu_custom_call.1} parent=5 // pred_check_branch
        %132 = sbr.rel (%p129) target = $region12
      $region11: #{tpu_custom_call.1} parent=5 // pred_region
        %s133 = ssub.s32 %s17, 1
      $region12: #{tpu_custom_call.1} parent=5 // pred_fallthru
        _
      %p134 = scmp.lt.s32.totalorder %s17, 2
      // Predicated region
      $region13: #{tpu_custom_call.1} parent=5 // pred_check
        %p135 = pneg %p134
      $region14: #{tpu_custom_call.1} parent=5 // pred_check_branch
        %137 = sbr.rel (%p135) target = $region16
      $region15: #{tpu_custom_call.1} parent=5 // pred_region
        // Predicated region
        $region17: #{tpu_custom_call.1} parent=15 // pred_check
          %p138 = pneg %p55
        $region18: #{tpu_custom_call.1} parent=15 // pred_check_branch
          %140 = sbr.rel (%p138) target = $region20
        $region19: #{tpu_custom_call.1} parent=15 // pred_region
          %s141 = sand.u32 %s45, 1
          %s142 = scalar_lea.sflag [#allocation3], %s141
          %s143 = sand.u32 %s45, 1
          %s144 = smul.addr %s143, 16
          %s145 = scalar_lea.vmem [#allocation2], %s144
          %s146 = sadd.s32 %s24, %s25
          %p147 = scmp.lt.s32.totalorder %s146, 0
          %s148 = scalar_select %p147, %s146, 0
          %s149 = smul.u32 2, %s148
          %s151 = ssub.s32 256, 256
          %152 = vsyncadd %s142, %s151
          %s153 = smul.addr %s149, 128
          %s154 = scalar_lea.hbm %s0, %s153
          %s155 = sshll.u32 %s145, 4
          %s156 = int_to_ptr.vmem [resolvable:$true] %s155
          %161 = dma.hbm_to_vmem [thread:$0]  %s154, 256, %s156, %s142, 128, 128, 8
        $region20: #{tpu_custom_call.1} parent=15 // pred_fallthru
          _
        // Predicated region
        $region21: #{tpu_custom_call.1} parent=15 // pred_check
          %p162 = pneg %p87
        $region22: #{tpu_custom_call.1} parent=15 // pred_check_branch
          %164 = sbr.rel (%p162) target = $region24
        $region23: #{tpu_custom_call.1} parent=15 // pred_region
          %s165 = sand.u32 %s77, 1
          %s166 = scalar_lea.sflag [#allocation6], %s165
          %s167 = sand.u32 %s77, 1
          %s168 = smul.addr %s167, 16
          %s169 = scalar_lea.vmem [#allocation5], %s168
          %s170 = sadd.s32 %s24, %s25
          %p171 = scmp.lt.s32.totalorder %s170, 0
          %s172 = scalar_select %p171, %s170, 0
          %s173 = smul.u32 2, %s172
          %s175 = ssub.s32 256, 256
          %176 = vsyncadd %s166, %s175
          %s177 = smul.addr %s173, 128
          %s178 = scalar_lea.hbm %s1, %s177
          %s179 = sshll.u32 %s169, 4
          %s180 = int_to_ptr.vmem [resolvable:$true] %s179
          %185 = dma.hbm_to_vmem [thread:$0]  %s178, 256, %s180, %s166, 128, 128, 8
        $region24: #{tpu_custom_call.1} parent=15 // pred_fallthru
          _
      $region16: #{tpu_custom_call.1} parent=5 // pred_fallthru
        _
      %p186 = scmp.le.s32.totalorder 1, %s17
      %p187 = scmp.lt.s32.totalorder %s17, 3
      %p188 = pnand %p186, %p187
      %p189 = pneg %p188
      // Predicated region
      $region25: #{tpu_custom_call.1} parent=5 // pred_check
        _
      $region26: #{tpu_custom_call.1} parent=5 // pred_check_branch
        %191 = sbr.rel (%p188) target = $region28
      $region27: #{tpu_custom_call.1} parent=5 // pred_region
        %s192 = ssub.s32 %s17, 1
        %s193 = sand.u32 %s48, 1
        %s194 = scalar_lea.sflag [#allocation3], %s193
        %s195 = sand.u32 %s48, 1
        %s196 = smul.addr %s195, 16
        %s197 = scalar_lea.vmem [#allocation2], %s196
        // Predicated region
        $region29: #{tpu_custom_call.1} parent=27 // pred_check
          %p198 = pneg %p61
        $region30: #{tpu_custom_call.1} parent=27 // pred_check_branch
          %200 = sbr.rel (%p198) target = $region32
        $region31: #{tpu_custom_call.1} parent=27 // pred_region
          %201 = dma.done %s194, 256
        $region32: #{tpu_custom_call.1} parent=27 // pred_fallthru
          _
        %s202 = sand.u32 %s80, 1
        %s203 = scalar_lea.sflag [#allocation6], %s202
        %s204 = sand.u32 %s80, 1
        %s205 = smul.addr %s204, 16
        %s206 = scalar_lea.vmem [#allocation5], %s205
        // Predicated region
        $region33: #{tpu_custom_call.1} parent=27 // pred_check
          %p207 = pneg %p93
        $region34: #{tpu_custom_call.1} parent=27 // pred_check_branch
          %209 = sbr.rel (%p207) target = $region36
        $region35: #{tpu_custom_call.1} parent=27 // pred_region
          %210 = dma.done %s203, 256
        $region36: #{tpu_custom_call.1} parent=27 // pred_fallthru
          _
        %s211 = sand.u32 %s48, 1
        %s212 = scalar_lea.sflag [#allocation3], %s211
        %s213 = sand.u32 %s48, 1
        %s214 = smul.addr %s213, 16
        %s215 = scalar_lea.vmem [#allocation2], %s214
        %p216 = pneg %p61
        %p217 = pneg %p58
        %s218 = sand.u32 %s80, 1
        %s219 = scalar_lea.sflag [#allocation6], %s218
        %s220 = sand.u32 %s80, 1
        %s221 = smul.addr %s220, 16
        %s222 = scalar_lea.vmem [#allocation5], %s221
        %p223 = pneg %p93
        %p224 = pneg %p90
        %p225 = pneg %p119
        %p226 = pneg %p116
        %s227 = sand.u32 %s106, 1
        %s228 = scalar_lea.sflag [#allocation4], %s227
        %s229 = sand.u32 %s106, 1
        %s230 = smul.addr %s229, 8
        %s231 = scalar_lea.vmem [#allocation7], %s230
        %s232 = sadd.s32 %s26, %s27
        %p233 = scmp.lt.s32.totalorder %s232, 0
        %s234 = scalar_select %p233, %s232, 0
        %s235 = smul.u32 2, %s234
        %s236 = sadd.s32 %s26, %s27
        %p237 = scmp.lt.s32.totalorder %s236, 0
        %s238 = scalar_select %p237, %s236, 0
        %s239 = smul.u32 2, %s238
        %s240 = sadd.s32 %s26, %s27
        %p241 = scmp.eq.s32.totalorder %s27, 0
        // Predicated region
        $region37: #{tpu_custom_call.1} parent=27 // pred_check
          %p242 = pneg %p241
        $region38: #{tpu_custom_call.1} parent=27 // pred_check_branch
          %244 = sbr.rel (%p242) target = $region40
        $region39: #{tpu_custom_call.1} parent=27 // pred_region
          %245 = vst [vmem:[%s231] sm:$0xff] 0.0
        $region40: #{tpu_custom_call.1} parent=27 // pred_fallthru
          _
        %v246 = vld [vmem:[%s197] sm:$0xff]
        %v247 = vld [vmem:[%s197 + $0x8] sm:$0xff]
        %v248 = vld [vmem:[%s206] sm:$0xff]
        %v249 = vld [vmem:[%s206 + $0x8] sm:$0xff]
        %v250 = vand.u32 2147483647, %v248
        %v251 = vand.u32 2147483647, %v249
        %v252 = vmax.f32 %v250, 1e-08
        %v253 = vmax.f32 %v251, 1e-08
        %v254 = vsub.f32 %v246, %v248
        %v255 = vsub.f32 %v247, %v249
        %v256 = vand.u32 2147483647, %v254
        %v257 = vand.u32 2147483647, %v255
        %v258 = vrcp.pop %v252
        %v259 = vrcp.pop %v253
        %v260 = vmul.f32 %v256, %v258
        %v261 = vmul.f32 %v257, %v259
        %s262 = smul.u32 %s240, 16
        %s263 = sadd.s32 %s262, 16
        %p264 = scmp.gt.s32.totalorder %s263, 16
        %p265 = scmp.le.s32.totalorder %s263, 16
        // Predicated region
        $region41: #{tpu_custom_call.1} parent=27 // pred_check
          %p266 = pneg %p265
        $region42: #{tpu_custom_call.1} parent=27 // pred_check_branch
          %268 = sbr.rel (%p266) target = $region44
        $region43: #{tpu_custom_call.1} parent=27 // pred_region
          %v269 = vld [vmem:[%s231] sm:$0xff]
          %v270 = vadd.f32 %v260, %v261
          %v271 = vadd.f32 %v269, %v270
          %272 = vst [vmem:[%s231] sm:$0xff] %v271
        $region44: #{tpu_custom_call.1} parent=27 // pred_fallthru
          _
        // Predicated region
        $region45: #{tpu_custom_call.1} parent=27 // pred_check
          %p273 = pneg %p264
        $region46: #{tpu_custom_call.1} parent=27 // pred_check_branch
          %275 = sbr.rel (%p273) target = $region48
        $region47: #{tpu_custom_call.1} parent=27 // pred_region
          %v276 = vlaneseq
          %v277 = vshrl.u32 %v276, 7
          %v278 = vadd.s32 %v277, 8
          %v279 = vstv %s262
          %v280 = vadd.s32 %v279, %v277
          %v281 = vadd.s32 %v279, %v278
          %vm282 = vcmp.lt.s32.totalorder %v280, 16
          %vm283 = vcmp.lt.s32.totalorder %v281, 16
          %v284 = vsel %vm282, %v260, 0.0
          %v285 = vsel %vm283, %v261, 0.0
          %v286 = vld [vmem:[%s231] sm:$0xff]
          %v287 = vadd.f32 %v284, %v285
          %v288 = vadd.f32 %v286, %v287
          %289 = vst [vmem:[%s231] sm:$0xff] %v288
        $region48: #{tpu_custom_call.1} parent=27 // pred_fallthru
          _
        %s290 = sand.u32 %s106, 1
        %s291 = scalar_lea.sflag [#allocation4], %s290
        %s292 = sand.u32 %s106, 1
        %s293 = smul.addr %s292, 8
        %s294 = scalar_lea.vmem [#allocation7], %s293
        // Predicated region
        $region49: #{tpu_custom_call.1} parent=27 // pred_check
          %p295 = pneg %p116
        $region50: #{tpu_custom_call.1} parent=27 // pred_check_branch
          %297 = sbr.rel (%p295) target = $region52
        $region51: #{tpu_custom_call.1} parent=27 // pred_region
          %s299 = ssub.s32 128, 128
          %300 = vsyncadd %s291, %s299
          %s301 = smul.addr %s26, 128
          %s302 = scalar_lea.hbm %s2, %s301
          %s304 = sshll.u32 %s294, 4
          %s305 = int_to_ptr.vmem [resolvable:$true] %s304
          %307 = dma.vmem_to_hbm [thread:$0]  %s305, 128, %s302, %s291
        $region52: #{tpu_custom_call.1} parent=27 // pred_fallthru
          _
      $region28: #{tpu_custom_call.1} parent=5 // pred_fallthru
        _
      %p308 = scmp.le.s32.totalorder 2, %s17
      // Predicated region
      $region53: #{tpu_custom_call.1} parent=5 // pred_check
        %p309 = pneg %p308
      $region54: #{tpu_custom_call.1} parent=5 // pred_check_branch
        %311 = sbr.rel (%p309) target = $region56
      $region55: #{tpu_custom_call.1} parent=5 // pred_region
        %s312 = ssub.s32 %s17, 2
        // Predicated region
        $region57: #{tpu_custom_call.1} parent=55 // pred_check
          %p313 = pneg %p122
        $region58: #{tpu_custom_call.1} parent=55 // pred_check_branch
          %315 = sbr.rel (%p313) target = $region60
        $region59: #{tpu_custom_call.1} parent=55 // pred_region
          %s316 = sand.u32 %s107, 1
          %s317 = scalar_lea.sflag [#allocation4], %s316
          %s318 = sand.u32 %s107, 1
          %s319 = smul.addr %s318, 8
          %s320 = scalar_lea.vmem [#allocation7], %s319
          %321 = dma.done %s317, 128
        $region60: #{tpu_custom_call.1} parent=55 // pred_fallthru
          _
      $region56: #{tpu_custom_call.1} parent=5 // pred_fallthru
        _
    $region6: #{tpu_custom_call.1} parent=1 // loop_footer
      %s21 = sadd.s32 1, %s17
    $region7: #{tpu_custom_call.1} parent=1 // loop_footer_branch
      %16 = sbr.rel target = $region3
    $region8: #{tpu_custom_call.1} parent=1 // loop_exit
      _
    %322 = vsyncpa [#allocation3], 1
    %s323 = scalar_lea.sflag [#allocation3], 1
    %324 = vsyncpa %s323, 1
    %325 = vsyncpa [#allocation6], 1
    %s326 = scalar_lea.sflag [#allocation6], 1
    %327 = vsyncpa %s326, 1
    %328 = vsyncpa [#allocation4], 1
    %s329 = scalar_lea.sflag [#allocation4], 1
    %330 = vsyncpa %s329, 1

</llo_original>
